<compile_context>
chip_gen: v5e
topology: v5e:2x2
jax: 0.10.0
libtpu: 0.0.40
codegen_flags: <defaults>
</compile_context>

<pallas_src>
import jax
import jax.numpy as jnp
from jax.experimental import pallas as pl
from jax.experimental.pallas import tpu as pltpu

EPS = 1e-12               # transformer_config.layer_norm_eps (BERT default)
TARGET_TILE_ROWS = 1024   # rows (batch_tile * (Lt + Li)) aimed for per grid step (mem-bound kernel;
                          # big tiles amortize the ~0.35us/step overhead; still tiny vs VMEM)
MATMUL_DTYPE = jnp.float32  # keep f32: faithful to the PyTorch module and safe for the 5e-3 check.
                            # On v6e/v7x this can be flipped to bf16 for the image Linear if the
                            # accuracy budget allows (the review notes ~3e-3 drift after LayerNorm).


# ----------------------------- in-kernel helpers -----------------------------
def _layernorm(x, gamma, beta, eps=EPS):
    mu = jnp.mean(x, axis=-1, keepdims=True)
    xc = x - mu
    var = jnp.mean(xc * xc, axis=-1, keepdims=True)
    return xc * jax.lax.rsqrt(var + eps) * gamma + beta


# --------------------------------- fused kernel -------------------------------
def _fused_kernel(wid_ref,                         # scalar prefetch: (B*Lt,) int32 word ids (SMEM)
                  t_ps_ref, i_ps_ref, x_ref,       # per-step tiled inputs
                  word_hbm_ref,                    # (V, H) word table, HBM-resident (pl.ANY)
                  pt_tbl_ref,                      # (Pt+Pi+NMOD, H) stacked pos/pos/type table
                  img_w_ref, vec_ref,              # (Dpad, H) image linear W, (8, H) packed vectors
                  out_ref,                         # (bt, Lt+Li, H)
                  wbuf_ref, gsem):                 # scratch: gathered word rows, DMA semaphore
    bt, _, hid = out_ref.shape
    n_t = t_ps_ref.shape[0]                        # bt * Lt
    n_i = i_ps_ref.shape[0]                        # bt * Li
    lt = n_t // bt
    li = n_i // bt
    k_pt = pt_tbl_ref.shape[0]

    # ---- 1. kick off the word-embedding row gather (HBM -> VMEM) ------------------------
    # Issued first so the DMAs overlap the image-modality compute below; drained just before
    # the text-modality math needs them.  All copies are identical-size rows, so the drain
    # loop can wait with a placeholder same-shape descriptor.
    tok0 = pl.program_id(0) * n_t

    def _issue(t, c):
        rid = wid_ref[tok0 + t]
        pltpu.make_async_copy(word_hbm_ref.at[rid], wbuf_ref.at[t], gsem.at[0]).start()
        return c
    jax.lax.fori_loop(0, n_t, _issue, 0)

    # packed (1, H) parameter vectors
    vec = vec_ref[...]
    img_b, img_ln_g, img_ln_b = vec[0:1, :], vec[1:2, :], vec[2:3, :]
    ln_t_g, ln_t_b = vec[3:4, :], vec[4:5, :]
    ln_i_g, ln_i_b = vec[5:6, :], vec[6:7, :]

    # (1, K) iota; the compares broadcast it against (rows, 1) id columns.
    cols = jax.lax.broadcasted_iota(jnp.int32, (1, k_pt), 1)
    pt_tbl = pt_tbl_ref[...]

    # ---- 2. image modality (overlaps the gather DMAs) ----------------------------------
    # nn.Sequential(Linear(embedding_dim, H), LayerNorm(H)), then + pos + type, then LayerNorm.
    h = jnp.dot(x_ref[...], img_w_ref[...], preferred_element_type=jnp.float32) + img_b
    h = _layernorm(h, img_ln_g, img_ln_b)
    i_ps = i_ps_ref[...]                           # (bt*li, 2): [pos_id + Pt, seg_id + Pt + Pi]
    i_oh = ((cols == i_ps[:, 0:1]) | (cols == i_ps[:, 1:2])).astype(MATMUL_DTYPE)
    h = h + jnp.dot(i_oh, pt_tbl, preferred_element_type=jnp.float32)   # pos + type in one matmul
    img_out = _layernorm(h, ln_i_g, ln_i_b)        # dropout = identity (eval mode)
    out_ref[:, lt:, :] = img_out.reshape(bt, li, hid)

    # ---- 3. text modality ----------------------------------------------------------------
    t_ps = t_ps_ref[...]                           # (bt*lt, 2): [pos_id, seg_id + Pt + Pi]
    t_oh = ((cols == t_ps[:, 0:1]) | (cols == t_ps[:, 1:2])).astype(MATMUL_DTYPE)
    t_pt = jnp.dot(t_oh, pt_tbl, preferred_element_type=jnp.float32)    # pos + type in one matmul

    def _drain(t, c):
        pltpu.make_async_copy(word_hbm_ref.at[0], wbuf_ref.at[0], gsem.at[0]).wait()
        return c
    jax.lax.fori_loop(0, n_t, _drain, 0)

    emb = wbuf_ref[...].astype(jnp.float32) + t_pt
    text_out = _layernorm(emb, ln_t_g, ln_t_b)     # dropout = identity (eval mode)
    out_ref[:, :lt, :] = text_out.reshape(bt, lt, hid)


# ------------------------------- pallas wrapper --------------------------------
def _full_spec(a):
    """Constant full-array input (block == array); index_map ignores grid + prefetch refs."""
    zeros = (0,) * a.ndim
    return pl.BlockSpec(a.shape, lambda i, *_: zeros)


def _pick_batch_tile(B, Lt, Li, target_rows=TARGET_TILE_ROWS):
    """Largest batch divisor with <= target rows per step AND >= 2 grid steps (v7x: 2 TCs)."""
    best = 1
    for bt in range(1, B + 1):
        if B % bt:
            continue
        if bt * (Lt + Li) > target_rows:
            continue
        if B >= 2 and (B // bt) < 2:
            continue
        best = bt
    return best


def mmf_transformer_embeddings(input_ids, position_ids, segment_ids, params, *, batch_tile=None):
    """input_ids = {"text": int32[B,Lt], "image": f32[B,Li,D]} (image 'ids' are features)."""
    B, Lt = input_ids["text"].shape
    _, Li, D = input_ids["image"].shape
    V, H = params["word_tbl"].shape
    Pt = params["pos_tbl_text"].shape[0]
    Pi = params["pos_tbl_img"].shape[0]

    # Keep middle-dim output slices and the (rows,H)->(bt,L,H) reshapes sublane-aligned.
    assert Lt % 8 == 0 and Li % 8 == 0, "pad sequence lengths to a multiple of 8"

    # Small stacked lookup table: [text positions | image positions | token types].
    pt_tbl = jnp.concatenate(
        [params["pos_tbl_text"], params["pos_tbl_img"], params["type_tbl"]],
        axis=0).astype(MATMUL_DTYPE)

    # Pre-offset ids so a single two-hot matmul against pt_tbl does pos+type per modality.
    t_ps = jnp.stack(
        [position_ids["text"].reshape(-1).astype(jnp.int32),
         segment_ids["text"].reshape(-1).astype(jnp.int32) + (Pt + Pi)], axis=1)
    i_ps = jnp.stack(
        [position_ids["image"].reshape(-1).astype(jnp.int32) + Pt,
         segment_ids["image"].reshape(-1).astype(jnp.int32) + (Pt + Pi)], axis=1)

    # Word ids go to SMEM via scalar prefetch and drive the in-kernel DMA row gather.
    word_ids = input_ids["text"].reshape(-1).astype(jnp.int32)
    word_tbl = params["word_tbl"].astype(jnp.float32)          # stays HBM-resident

    # Image features / weight: zero-pad K to a multiple of 128 lanes (full-lane loads).
    Dp = max(128, ((D + 127) // 128) * 128)
    x_img = input_ids["image"].reshape(B * Li, D).astype(MATMUL_DTYPE)
    img_w = params["img_w"].astype(MATMUL_DTYPE)
    if Dp != D:
        x_img = jnp.pad(x_img, ((0, 0), (0, Dp - D)))
        img_w = jnp.pad(img_w, ((0, Dp - D), (0, 0)))

    # Pack the seven (1,H) bias / LayerNorm vectors into one (8,H) block (one DMA).
    vec_params = jnp.concatenate(
        [params["img_b"], params["img_ln_g"], params["img_ln_b"],
         params["ln_text_g"], params["ln_text_b"],
         params["ln_img_g"], params["ln_img_b"],
         jnp.zeros((1, H), jnp.float32)], axis=0)

    bt = batch_tile if batch_tile is not None else _pick_batch_tile(B, Lt, Li)
    assert B % bt == 0, (B, bt)

    grid_spec = pltpu.PrefetchScalarGridSpec(
        num_scalar_prefetch=1,                    # word_ids -> SMEM, visible to kernel + index_maps
        grid=(B // bt,),
        in_specs=[
            pl.BlockSpec((bt * Lt, 2), lambda i, *_: (i, 0)),   # packed text pos/seg ids
            pl.BlockSpec((bt * Li, 2), lambda i, *_: (i, 0)),   # packed image pos/seg ids
            pl.BlockSpec((bt * Li, Dp), lambda i, *_: (i, 0)),  # image features (lane-padded)
            pl.BlockSpec(memory_space=pl.ANY),                  # word table: HBM, manual gather
            _full_spec(pt_tbl),
            _full_spec(img_w),
            _full_spec(vec_params),
        ],
        out_specs=pl.BlockSpec((bt, Lt + Li, H), lambda i, *_: (i, 0, 0)),
        scratch_shapes=[
            pltpu.VMEM((bt * Lt, H), jnp.float32),              # gathered word rows
            pltpu.SemaphoreType.DMA((1,)),                      # gather completion semaphore
        ],
    )

    return pl.pallas_call(
        _fused_kernel,
        out_shape=jax.ShapeDtypeStruct((B, Lt + Li, H), jnp.float32),
        grid_spec=grid_spec,
        compiler_params=pltpu.CompilerParams(dimension_semantics=("parallel",)),
    )(word_ids, t_ps, i_ps, x_img, word_tbl, pt_tbl, img_w, vec_params)


# --------------------------------- reference ----------------------------------
def _reference(input_ids, position_ids, segment_ids, p):
    t = (p["word_tbl"][input_ids["text"]]
         + p["pos_tbl_text"][position_ids["text"]]
         + p["type_tbl"][segment_ids["text"]])
    t = _layernorm(t, p["ln_text_g"][0], p["ln_text_b"][0])

    im = jnp.einsum("bld,dh->blh", input_ids["image"], p["img_w"]) + p["img_b"][0]
    im = _layernorm(im, p["img_ln_g"][0], p["img_ln_b"][0])
    im = im + p["pos_tbl_img"][position_ids["image"]] + p["type_tbl"][segment_ids["image"]]
    im = _layernorm(im, p["ln_img_g"][0], p["ln_img_b"][0])
    return jnp.concatenate([t, im], axis=1)


# ----------------------------------- main --------------------------------------
if __name__ == "__main__":
    B, Lt, Li = 2, 8, 8
    H, V, P, D, NMOD = 128, 96, 32, 64, 2

    key = jax.random.PRNGKey(0)
    ks = jax.random.split(key, 16)

    params = {
        "word_tbl": (0.02 * jax.random.normal(ks[0], (V, H), jnp.float32)).at[0].set(0.0),  # padding_idx=0
        "pos_tbl_text": 0.02 * jax.random.normal(ks[1], (P, H), jnp.float32),
        "type_tbl": 0.02 * jax.random.normal(ks[2], (NMOD, H), jnp.float32),
        "ln_text_g": 1.0 + 0.1 * jax.random.normal(ks[3], (1, H), jnp.float32),
        "ln_text_b": 0.1 * jax.random.normal(ks[4], (1, H), jnp.float32),
        "img_w": 0.02 * jax.random.normal(ks[5], (D, H), jnp.float32),
        "img_b": 0.01 * jax.random.normal(ks[6], (1, H), jnp.float32),
        "img_ln_g": 1.0 + 0.1 * jax.random.normal(ks[7], (1, H), jnp.float32),
        "img_ln_b": 0.1 * jax.random.normal(ks[8], (1, H), jnp.float32),
        "ln_img_g": 1.0 + 0.1 * jax.random.normal(ks[9], (1, H), jnp.float32),
        "ln_img_b": 0.1 * jax.random.normal(ks[10], (1, H), jnp.float32),
    }
    # init_weights copies the transformer position table into every modality's pos embedding.
    params["pos_tbl_img"] = params["pos_tbl_text"]

    input_ids = {
        "text": jax.random.randint(ks[11], (B, Lt), 0, V, dtype=jnp.int32),
        "image": jax.random.normal(ks[12], (B, Li, D), jnp.float32),
    }
    position_ids = {
        "text": jnp.broadcast_to(jnp.arange(Lt, dtype=jnp.int32), (B, Lt)),
        "image": jnp.broadcast_to(jnp.arange(Li, dtype=jnp.int32), (B, Li)),
    }
    segment_ids = {
        "text": jnp.zeros((B, Lt), jnp.int32),
        "image": jnp.ones((B, Li), jnp.int32),
    }

    ref = _reference(input_ids, position_ids, segment_ids, params)

    # Default tiling: >= 2 grid steps (bt=1 here) so the pipelined / megacore path is exercised.
    out = jax.block_until_ready(
        mmf_transformer_embeddings(input_ids, position_ids, segment_ids, params))
    assert out.shape == (B, Lt + Li, H), out.shape
    assert jnp.allclose(out, ref, rtol=5e-3, atol=5e-3), float(jnp.max(jnp.abs(out - ref)))

    # Also exercise the single-step (whole batch in one tile) path.
    out2 = jax.block_until_ready(
        mmf_transformer_embeddings(input_ids, position_ids, segment_ids, params, batch_tile=B))
    assert jnp.allclose(out2, ref, rtol=5e-3, atol=5e-3), float(jnp.max(jnp.abs(out2 - ref)))

    print("KERNEL_OK")
</pallas_src>

<mosaic_0001>
module attributes {stable_mosaic.version = 11 : i64} {
  func.func @_fused_kernel(%arg0: i32, %arg1: memref<16xi32, #tpu.memory_space<smem>>, %arg2: memref<8x2xi32, #tpu.memory_space<vmem>>, %arg3: memref<8x2xi32, #tpu.memory_space<vmem>>, %arg4: memref<8x128xf32, #tpu.memory_space<vmem>>, %arg5: memref<96x128xf32, #tpu.memory_space<any>>, %arg6: memref<66x128xf32, #tpu.memory_space<vmem>>, %arg7: memref<128x128xf32, #tpu.memory_space<vmem>>, %arg8: memref<8x128xf32, #tpu.memory_space<vmem>>, %arg9: memref<1x16x128xf32, #tpu.memory_space<vmem>>, %arg10: memref<8x128xf32, #tpu.memory_space<vmem>>, %arg11: memref<1x!tpu.dma_semaphore, #tpu.memory_space<semaphore_mem>>) attributes {dimension_semantics = [#tpu.dimension_semantics<parallel>], iteration_bounds = array<i64: 2>, scalar_prefetch = 1 : i64, scratch_operands = 2 : i64, tpu.core_type = #tpu.core_type<tc>, window_params = [{transform_indices = @transform_0, window_bounds = array<i64: 8, 2>}, {transform_indices = @transform_1, window_bounds = array<i64: 8, 2>}, {transform_indices = @transform_2, window_bounds = array<i64: 8, 128>}, {}, {pipeline_mode = #tpu.pipeline_mode<synchronous>, transform_indices = @transform_4, window_bounds = array<i64: 66, 128>}, {pipeline_mode = #tpu.pipeline_mode<synchronous>, transform_indices = @transform_5, window_bounds = array<i64: 128, 128>}, {pipeline_mode = #tpu.pipeline_mode<synchronous>, transform_indices = @transform_6, window_bounds = array<i64: 8, 128>}, {transform_indices = @transform_7, window_bounds = array<i64: 1, 16, 128>}]} {
    %c8_i32 = arith.constant 8 : i32
    %0 = arith.muli %arg0, %c8_i32 : i32
    %c0_i32 = arith.constant 0 : i32
    %c8_i32_0 = arith.constant 8 : i32
    %1 = arith.addi %c0_i32, %c8_i32_0 : i32
    %c1_i32 = arith.constant 1 : i32
    scf.for %arg12 = %c0_i32 to %1 step %c1_i32  : i32 {
      %111 = arith.addi %0, %arg12 : i32
      %112 = arith.index_cast %111 : i32 to index
      %113 = memref.load %arg1[%112] : memref<16xi32, #tpu.memory_space<smem>>
      %c0_i32_40 = arith.constant 0 : i32
      %c0_i32_41 = arith.constant 0 : i32
      %114 = tpu.memref_slice %arg5[%113, %c0_i32_41] : memref<96x128xf32, #tpu.memory_space<any>> -> memref<1x128xf32, #tpu.memory_space<any>>
      %115 = tpu.memref_squeeze %114 : memref<1x128xf32, #tpu.memory_space<any>> -> memref<128xf32, #tpu.memory_space<any>>
      %c0_i32_42 = arith.constant 0 : i32
      %116 = tpu.memref_slice %arg10[%arg12, %c0_i32_42] : memref<8x128xf32, #tpu.memory_space<vmem>> -> memref<1x128xf32, #tpu.memory_space<vmem>>
      %117 = tpu.memref_squeeze %116 : memref<1x128xf32, #tpu.memory_space<vmem>> -> memref<128xf32, #tpu.memory_space<vmem>>
      %118 = tpu.memref_slice %arg11[%c0_i32_40] : memref<1x!tpu.dma_semaphore, #tpu.memory_space<semaphore_mem>> -> memref<1x!tpu.dma_semaphore, #tpu.memory_space<semaphore_mem>>
      %119 = tpu.memref_squeeze %118 : memref<1x!tpu.dma_semaphore, #tpu.memory_space<semaphore_mem>> -> memref<!tpu.dma_semaphore, #tpu.memory_space<semaphore_mem>>
      tpu.enqueue_dma source(%115 : memref<128xf32, #tpu.memory_space<any>>) target(%117 : memref<128xf32, #tpu.memory_space<vmem>>) target_semaphore(%119 : memref<!tpu.dma_semaphore, #tpu.memory_space<semaphore_mem>>)
    }
    %c8_i32_1 = arith.constant 8 : i32
    %c0 = arith.constant 0 : index
    %c0_2 = arith.constant 0 : index
    %2 = vector.load %arg8[%c0, %c0_2] : memref<8x128xf32, #tpu.memory_space<vmem>>, vector<8x128xf32>
    %3 = vector.extract_strided_slice %2 {offsets = [0, 0], sizes = [1, 128], strides = [1, 1]} : vector<8x128xf32> to vector<1x128xf32>
    %4 = vector.extract_strided_slice %2 {offsets = [1, 0], sizes = [1, 128], strides = [1, 1]} : vector<8x128xf32> to vector<1x128xf32>
    %5 = vector.extract_strided_slice %2 {offsets = [2, 0], sizes = [1, 128], strides = [1, 1]} : vector<8x128xf32> to vector<1x128xf32>
    %6 = vector.extract_strided_slice %2 {offsets = [3, 0], sizes = [1, 128], strides = [1, 1]} : vector<8x128xf32> to vector<1x128xf32>
    %7 = vector.extract_strided_slice %2 {offsets = [4, 0], sizes = [1, 128], strides = [1, 1]} : vector<8x128xf32> to vector<1x128xf32>
    %8 = vector.extract_strided_slice %2 {offsets = [5, 0], sizes = [1, 128], strides = [1, 1]} : vector<8x128xf32> to vector<1x128xf32>
    %9 = vector.extract_strided_slice %2 {offsets = [6, 0], sizes = [1, 128], strides = [1, 1]} : vector<8x128xf32> to vector<1x128xf32>
    %10 = tpu.iota {dimensions = array<i32: 1>} : vector<1x66xi32>
    %c0_3 = arith.constant 0 : index
    %c0_4 = arith.constant 0 : index
    %11 = vector.load %arg6[%c0_3, %c0_4] : memref<66x128xf32, #tpu.memory_space<vmem>>, vector<66x128xf32>
    %c0_5 = arith.constant 0 : index
    %c0_6 = arith.constant 0 : index
    %12 = vector.load %arg4[%c0_5, %c0_6] : memref<8x128xf32, #tpu.memory_space<vmem>>, vector<8x128xf32>
    %c0_7 = arith.constant 0 : index
    %c0_8 = arith.constant 0 : index
    %13 = vector.load %arg7[%c0_7, %c0_8] : memref<128x128xf32, #tpu.memory_space<vmem>>, vector<128x128xf32>
    %cst = arith.constant dense<0.000000e+00> : vector<8x128xf32>
    %14 = tpu.matmul %12, %13, %cst {dimension_numbers = #tpu.dot_dimension_numbers<[1], [0], [0], [1], [0, 0, 1, 1], [], []>} : vector<8x128xf32>, vector<128x128xf32>, vector<8x128xf32> -> vector<8x128xf32>
    %15 = vector.broadcast %3 : vector<1x128xf32> to vector<8x128xf32>
    %16 = arith.addf %14, %15 : vector<8x128xf32>
    %cst_9 = arith.constant dense<0.000000e+00> : vector<8xf32>
    %17 = vector.multi_reduction <add>, %16, %cst_9 [1] : vector<8x128xf32> to vector<8xf32>
    %18 = vector.shape_cast %17 : vector<8xf32> to vector<8x1xf32>
    %cst_10 = arith.constant 1.280000e+02 : f32
    %19 = vector.broadcast %cst_10 : f32 to vector<8x1xf32>
    %20 = arith.divf %18, %19 : vector<8x1xf32>
    %21 = vector.broadcast %20 : vector<8x1xf32> to vector<8x128xf32>
    %22 = arith.subf %16, %21 : vector<8x128xf32>
    %23 = arith.mulf %22, %22 : vector<8x128xf32>
    %cst_11 = arith.constant dense<0.000000e+00> : vector<8xf32>
    %24 = vector.multi_reduction <add>, %23, %cst_11 [1] : vector<8x128xf32> to vector<8xf32>
    %25 = vector.shape_cast %24 : vector<8xf32> to vector<8x1xf32>
    %cst_12 = arith.constant 1.280000e+02 : f32
    %26 = vector.broadcast %cst_12 : f32 to vector<8x1xf32>
    %27 = arith.divf %25, %26 : vector<8x1xf32>
    %cst_13 = arith.constant 9.99999996E-13 : f32
    %28 = vector.broadcast %cst_13 : f32 to vector<8x1xf32>
    %29 = arith.addf %27, %28 : vector<8x1xf32>
    %30 = math.rsqrt %29 : vector<8x1xf32>
    %31 = vector.broadcast %30 : vector<8x1xf32> to vector<8x128xf32>
    %32 = arith.mulf %22, %31 : vector<8x128xf32>
    %33 = vector.broadcast %4 : vector<1x128xf32> to vector<8x128xf32>
    %34 = arith.mulf %32, %33 : vector<8x128xf32>
    %35 = vector.broadcast %5 : vector<1x128xf32> to vector<8x128xf32>
    %36 = arith.addf %34, %35 : vector<8x128xf32>
    %c0_14 = arith.constant 0 : index
    %c0_15 = arith.constant 0 : index
    %37 = vector.load %arg3[%c0_14, %c0_15] : memref<8x2xi32, #tpu.memory_space<vmem>>, vector<8x2xi32>
    %38 = vector.extract_strided_slice %37 {offsets = [0, 0], sizes = [8, 1], strides = [1, 1]} : vector<8x2xi32> to vector<8x1xi32>
    %39 = vector.broadcast %10 : vector<1x66xi32> to vector<8x66xi32>
    %40 = vector.broadcast %38 : vector<8x1xi32> to vector<8x66xi32>
    %41 = arith.cmpi eq, %39, %40 : vector<8x66xi32>
    %42 = vector.extract_strided_slice %37 {offsets = [0, 1], sizes = [8, 1], strides = [1, 1]} : vector<8x2xi32> to vector<8x1xi32>
    %43 = vector.broadcast %10 : vector<1x66xi32> to vector<8x66xi32>
    %44 = vector.broadcast %42 : vector<8x1xi32> to vector<8x66xi32>
    %45 = arith.cmpi eq, %43, %44 : vector<8x66xi32>
    %46 = arith.ori %41, %45 : vector<8x66xi1>
    %47 = arith.extui %46 : vector<8x66xi1> to vector<8x66xi32>
    %48 = arith.sitofp %47 : vector<8x66xi32> to vector<8x66xf32>
    %cst_16 = arith.constant dense<0.000000e+00> : vector<8x128xf32>
    %49 = tpu.matmul %48, %11, %cst_16 {dimension_numbers = #tpu.dot_dimension_numbers<[1], [0], [0], [1], [0, 0, 1, 1], [], []>} : vector<8x66xf32>, vector<66x128xf32>, vector<8x128xf32> -> vector<8x128xf32>
    %50 = arith.addf %36, %49 : vector<8x128xf32>
    %cst_17 = arith.constant dense<0.000000e+00> : vector<8xf32>
    %51 = vector.multi_reduction <add>, %50, %cst_17 [1] : vector<8x128xf32> to vector<8xf32>
    %52 = vector.shape_cast %51 : vector<8xf32> to vector<8x1xf32>
    %cst_18 = arith.constant 1.280000e+02 : f32
    %53 = vector.broadcast %cst_18 : f32 to vector<8x1xf32>
    %54 = arith.divf %52, %53 : vector<8x1xf32>
    %55 = vector.broadcast %54 : vector<8x1xf32> to vector<8x128xf32>
    %56 = arith.subf %50, %55 : vector<8x128xf32>
    %57 = arith.mulf %56, %56 : vector<8x128xf32>
    %cst_19 = arith.constant dense<0.000000e+00> : vector<8xf32>
    %58 = vector.multi_reduction <add>, %57, %cst_19 [1] : vector<8x128xf32> to vector<8xf32>
    %59 = vector.shape_cast %58 : vector<8xf32> to vector<8x1xf32>
    %cst_20 = arith.constant 1.280000e+02 : f32
    %60 = vector.broadcast %cst_20 : f32 to vector<8x1xf32>
    %61 = arith.divf %59, %60 : vector<8x1xf32>
    %cst_21 = arith.constant 9.99999996E-13 : f32
    %62 = vector.broadcast %cst_21 : f32 to vector<8x1xf32>
    %63 = arith.addf %61, %62 : vector<8x1xf32>
    %64 = math.rsqrt %63 : vector<8x1xf32>
    %65 = vector.broadcast %64 : vector<8x1xf32> to vector<8x128xf32>
    %66 = arith.mulf %56, %65 : vector<8x128xf32>
    %67 = vector.broadcast %8 : vector<1x128xf32> to vector<8x128xf32>
    %68 = arith.mulf %66, %67 : vector<8x128xf32>
    %69 = vector.broadcast %9 : vector<1x128xf32> to vector<8x128xf32>
    %70 = arith.addf %68, %69 : vector<8x128xf32>
    %71 = vector.shape_cast %70 : vector<8x128xf32> to vector<1x8x128xf32>
    %c0_22 = arith.constant 0 : index
    %c8 = arith.constant 8 : index
    %c0_23 = arith.constant 0 : index
    %72 = vector.load %arg9[%c0_22, %c8, %c0_23] : memref<1x16x128xf32, #tpu.memory_space<vmem>>, vector<1x8x128xf32>
    tpu.vector_store %arg9[%c0_22, %c8, %c0_23], %71 {strides = array<i32>} : memref<1x16x128xf32, #tpu.memory_space<vmem>>, vector<1x8x128xf32>,
    %c0_24 = arith.constant 0 : index
    %c0_25 = arith.constant 0 : index
    %73 = vector.load %arg2[%c0_24, %c0_25] : memref<8x2xi32, #tpu.memory_space<vmem>>, vector<8x2xi32>
    %74 = vector.extract_strided_slice %73 {offsets = [0, 0], sizes = [8, 1], strides = [1, 1]} : vector<8x2xi32> to vector<8x1xi32>
    %75 = vector.broadcast %10 : vector<1x66xi32> to vector<8x66xi32>
    %76 = vector.broadcast %74 : vector<8x1xi32> to vector<8x66xi32>
    %77 = arith.cmpi eq, %75, %76 : vector<8x66xi32>
    %78 = vector.extract_strided_slice %73 {offsets = [0, 1], sizes = [8, 1], strides = [1, 1]} : vector<8x2xi32> to vector<8x1xi32>
    %79 = vector.broadcast %10 : vector<1x66xi32> to vector<8x66xi32>
    %80 = vector.broadcast %78 : vector<8x1xi32> to vector<8x66xi32>
    %81 = arith.cmpi eq, %79, %80 : vector<8x66xi32>
    %82 = arith.ori %77, %81 : vector<8x66xi1>
    %83 = arith.extui %82 : vector<8x66xi1> to vector<8x66xi32>
    %84 = arith.sitofp %83 : vector<8x66xi32> to vector<8x66xf32>
    %cst_26 = arith.constant dense<0.000000e+00> : vector<8x128xf32>
    %85 = tpu.matmul %84, %11, %cst_26 {dimension_numbers = #tpu.dot_dimension_numbers<[1], [0], [0], [1], [0, 0, 1, 1], [], []>} : vector<8x66xf32>, vector<66x128xf32>, vector<8x128xf32> -> vector<8x128xf32>
    %c0_i32_27 = arith.constant 0 : i32
    %c8_i32_28 = arith.constant 8 : i32
    %86 = arith.addi %c0_i32_27, %c8_i32_28 : i32
    %c1_i32_29 = arith.constant 1 : i32
    scf.for %arg12 = %c0_i32_27 to %86 step %c1_i32_29  : i32 {
      %c0_i32_40 = arith.constant 0 : i32
      %c0_i32_41 = arith.constant 0 : i32
      %c0_i32_42 = arith.constant 0 : i32
      %c0_i32_43 = arith.constant 0 : i32
      %111 = tpu.memref_slice %arg5[%c0_i32_40, %c0_i32_43] : memref<96x128xf32, #tpu.memory_space<any>> -> memref<1x128xf32, #tpu.memory_space<any>>
      %112 = tpu.memref_squeeze %111 : memref<1x128xf32, #tpu.memory_space<any>> -> memref<128xf32, #tpu.memory_space<any>>
      %c0_i32_44 = arith.constant 0 : i32
      %113 = tpu.memref_slice %arg10[%c0_i32_41, %c0_i32_44] : memref<8x128xf32, #tpu.memory_space<vmem>> -> memref<1x128xf32, #tpu.memory_space<vmem>>
      %114 = tpu.memref_squeeze %113 : memref<1x128xf32, #tpu.memory_space<vmem>> -> memref<128xf32, #tpu.memory_space<vmem>>
      %115 = tpu.memref_slice %arg11[%c0_i32_42] : memref<1x!tpu.dma_semaphore, #tpu.memory_space<semaphore_mem>> -> memref<1x!tpu.dma_semaphore, #tpu.memory_space<semaphore_mem>>
      %116 = tpu.memref_squeeze %115 : memref<1x!tpu.dma_semaphore, #tpu.memory_space<semaphore_mem>> -> memref<!tpu.dma_semaphore, #tpu.memory_space<semaphore_mem>>
      tpu.wait_dma2 semaphore(%116 : memref<!tpu.dma_semaphore, #tpu.memory_space<semaphore_mem>>) src(%112 : memref<128xf32, #tpu.memory_space<any>>) dst(%114 : memref<128xf32, #tpu.memory_space<vmem>>)
    }
    %c0_30 = arith.constant 0 : index
    %c0_31 = arith.constant 0 : index
    %87 = vector.load %arg10[%c0_30, %c0_31] : memref<8x128xf32, #tpu.memory_space<vmem>>, vector<8x128xf32>
    %88 = arith.addf %87, %85 : vector<8x128xf32>
    %cst_32 = arith.constant dense<0.000000e+00> : vector<8xf32>
    %89 = vector.multi_reduction <add>, %88, %cst_32 [1] : vector<8x128xf32> to vector<8xf32>
    %90 = vector.shape_cast %89 : vector<8xf32> to vector<8x1xf32>
    %cst_33 = arith.constant 1.280000e+02 : f32
    %91 = vector.broadcast %cst_33 : f32 to vector<8x1xf32>
    %92 = arith.divf %90, %91 : vector<8x1xf32>
    %93 = vector.broadcast %92 : vector<8x1xf32> to vector<8x128xf32>
    %94 = arith.subf %88, %93 : vector<8x128xf32>
    %95 = arith.mulf %94, %94 : vector<8x128xf32>
    %cst_34 = arith.constant dense<0.000000e+00> : vector<8xf32>
    %96 = vector.multi_reduction <add>, %95, %cst_34 [1] : vector<8x128xf32> to vector<8xf32>
    %97 = vector.shape_cast %96 : vector<8xf32> to vector<8x1xf32>
    %cst_35 = arith.constant 1.280000e+02 : f32
    %98 = vector.broadcast %cst_35 : f32 to vector<8x1xf32>
    %99 = arith.divf %97, %98 : vector<8x1xf32>
    %cst_36 = arith.constant 9.99999996E-13 : f32
    %100 = vector.broadcast %cst_36 : f32 to vector<8x1xf32>
    %101 = arith.addf %99, %100 : vector<8x1xf32>
    %102 = math.rsqrt %101 : vector<8x1xf32>
    %103 = vector.broadcast %102 : vector<8x1xf32> to vector<8x128xf32>
    %104 = arith.mulf %94, %103 : vector<8x128xf32>
    %105 = vector.broadcast %6 : vector<1x128xf32> to vector<8x128xf32>
    %106 = arith.mulf %104, %105 : vector<8x128xf32>
    %107 = vector.broadcast %7 : vector<1x128xf32> to vector<8x128xf32>
    %108 = arith.addf %106, %107 : vector<8x128xf32>
    %109 = vector.shape_cast %108 : vector<8x128xf32> to vector<1x8x128xf32>
    %c0_37 = arith.constant 0 : index
    %c0_38 = arith.constant 0 : index
    %c0_39 = arith.constant 0 : index
    %110 = vector.load %arg9[%c0_37, %c0_38, %c0_39] : memref<1x16x128xf32, #tpu.memory_space<vmem>>, vector<1x8x128xf32>
    tpu.vector_store %arg9[%c0_37, %c0_38, %c0_39], %109 {strides = array<i32>} : memref<1x16x128xf32, #tpu.memory_space<vmem>>, vector<1x8x128xf32>,
    return
  }
  func.func @transform_0(%arg0: i32, %arg1: memref<16xi32, #tpu.memory_space<smem>>) -> (i32, i32) {
    %c0_i32 = arith.constant 0 : i32
    %c0_i32_0 = arith.constant 0 : i32
    return %arg0, %c0_i32 : i32, i32
  }
  func.func @transform_1(%arg0: i32, %arg1: memref<16xi32, #tpu.memory_space<smem>>) -> (i32, i32) {
    %c0_i32 = arith.constant 0 : i32
    %c0_i32_0 = arith.constant 0 : i32
    return %arg0, %c0_i32 : i32, i32
  }
  func.func @transform_2(%arg0: i32, %arg1: memref<16xi32, #tpu.memory_space<smem>>) -> (i32, i32) {
    %c0_i32 = arith.constant 0 : i32
    %c0_i32_0 = arith.constant 0 : i32
    return %arg0, %c0_i32 : i32, i32
  }
  func.func @transform_4(%arg0: i32, %arg1: memref<16xi32, #tpu.memory_space<smem>>) -> (i32, i32) {
    %c0_i32 = arith.constant 0 : i32
    %c0_i32_0 = arith.constant 0 : i32
    %c0_i32_1 = arith.constant 0 : i32
    return %c0_i32, %c0_i32_0 : i32, i32
  }
  func.func @transform_5(%arg0: i32, %arg1: memref<16xi32, #tpu.memory_space<smem>>) -> (i32, i32) {
    %c0_i32 = arith.constant 0 : i32
    %c0_i32_0 = arith.constant 0 : i32
    %c0_i32_1 = arith.constant 0 : i32
    return %c0_i32, %c0_i32_0 : i32, i32
  }
  func.func @transform_6(%arg0: i32, %arg1: memref<16xi32, #tpu.memory_space<smem>>) -> (i32, i32) {
    %c0_i32 = arith.constant 0 : i32
    %c0_i32_0 = arith.constant 0 : i32
    %c0_i32_1 = arith.constant 0 : i32
    return %c0_i32, %c0_i32_0 : i32, i32
  }
  func.func @transform_7(%arg0: i32, %arg1: memref<16xi32, #tpu.memory_space<smem>>) -> (i32, i32, i32) {
    %c0_i32 = arith.constant 0 : i32
    %c0_i32_0 = arith.constant 0 : i32
    %c0_i32_1 = arith.constant 0 : i32
    return %arg0, %c0_i32, %c0_i32_0 : i32, i32, i32
  }
}

</mosaic_0001>

<llo_original>
// kernel: tpu_custom_call.1
$region0: #{tpu_custom_call.1}
  #allocation0 [shape = 'u32[]', space=smem, size = 0x4, offset = 0x4, fixed_abs, tag = 'smem constant byte address 0x4 - core index']
  #allocation1 [shape = 'u32[72,128]{1,0:T(1,128)}', space=vmem, size = 0x9000, scoped, tag = 'internal scratch']
  #allocation2 [shape = 'f32[8,128]{1,0:T(8,128)}', space=vmem, size = 0x1000, scoped, tag = 'scratch operand']
  #allocation3 [shape = 's32[1]{0}', space=sflag, size = 0x4, scoped, tag = 'scratch operand']
  #allocation4 [shape = 's32[1]{0}', space=sflag, size = 0x4, scoped, tag = 'scoped memory for tpu_custom_call.1']
  #allocation5 [shape = 'u8[512]{0}', space=smem, size = 0x200, scoped, tag = 'prefetched SMEM operand 0']
  #allocation12 [shape = 's32[]', space=sflag, size = 0x4, offset = 0, fixed_abs, tag = 'sflag constant byte address 0x0 - dummy sync flag']
  #allocation13 [shape = 's32[]', space=sflag, size = 0x4, offset = 0, fixed_abs, tag = 'sflag constant byte address 0x0 - dummy sync flag']
  #allocation14 [shape = 'u32[]', space=smem, size = 0x4, offset = 0x44, fixed_abs, tag = 'smem constant byte address 0x44 - assertion arg 0']
  #allocation15 [shape = 'u32[]', space=smem, size = 0x4, offset = 0x48, fixed_abs, tag = 'smem constant byte address 0x48 - assertion arg 1']
  %s0 = inlined_call_operand.vmem [shape: s32[16], index: 0, kind: input, shape index: {}]
  %s1 = inlined_call_operand.vmem [shape: s32[16,2], index: 1, kind: input, shape index: {}]
  %s2 = inlined_call_operand.vmem [shape: s32[16,2], index: 2, kind: input, shape index: {}]
  %s3 = inlined_call_operand.vmem [shape: f32[16,128], index: 3, kind: input, shape index: {}]
  %s4 = inlined_call_operand.hbm [shape: f32[96,128], index: 4, kind: input, shape index: {}]
  %s5 = inlined_call_operand.hbm [shape: f32[66,128], index: 5, kind: input, shape index: {}]
  %s6 = inlined_call_operand.hbm [shape: f32[128,128], index: 6, kind: input, shape index: {}]
  %s7 = inlined_call_operand.vmem [shape: f32[8,128], index: 7, kind: input, shape index: {}]
  %s8 = inlined_call_operand.hbm [shape: f32[2,16,128], index: 8, kind: output, shape index: {}]
  %s9 = sld [smem:[#allocation0]]
  $region83: #{tpu_custom_call.1} parent=0
    _
  %s11 = ssub.s32 1, %s9
  %s12 = scalar_select 0, %s11, %s9
  %s14 = sshll.u32 %s0, 4
  %s15 = int_to_ptr.vmem [resolvable:$true] %s14
  %17 = dma.vmem_to_smem %s15, 16, [#allocation5], [#allocation4]
  %19 = dma.done [#allocation4], 16
  %20 = sfence
  $region1: #{tpu_custom_call.1} parent=0
    #allocation6 [shape = 'u8[36864]{0}', space=vmem, size = 0x9000, scoped, tag = 'input window, operand 5, single buffered']
    #allocation7 [shape = 's32[2]{0}', space=sflag, size = 0x8, scoped, tag = 'scoped memory for tpu_custom_call.1']
    #allocation8 [shape = 's32[2]{0}', space=sflag, size = 0x8, scoped, tag = 'scoped memory for tpu_custom_call.1']
    #allocation9 [shape = 'u8[65536]{0}', space=vmem, size = 0x10000, scoped, tag = 'input window, operand 6, single buffered']
    #allocation10 [shape = 's32[1]{0}', space=sflag, size = 0x4, scoped, tag = 'scoped memory for tpu_custom_call.1']
    #allocation11 [shape = 'u8[16384]{0}', space=vmem, size = 0x4000, scoped, tag = 'output window, operand 0']
    %21 = vsyncpa [#allocation7], 0
    %22 = vsyncpa [#allocation10], 0
    %23 = vsyncpa [#allocation8], 0
    %s24 = scalar_lea.sflag [#allocation8], 1
    %25 = vsyncpa %s24, 0
    loop: start=0, step=1, limit=4
    $region2: #{tpu_custom_call.1} parent=1 // loop_pre_header
      _
    $region3: #{tpu_custom_call.1} parent=1 // loop_header
      %s27 = sphi 0, %s31
      %p28 = scmp.ge.s32.totalorder %s27, 4
      %s37 = sphi 0, %s39
      %s40 = sphi 0, %s37
      %s41 = sphi 0, %s40
      %s57 = sphi 0, %s41
      %s63 = sphi 0, %s65
      %s66 = sphi 0, %s63
      %s67 = sphi 0, %s66
      %s83 = sphi 0, %s67
      %s89 = sphi 0, %s91
      %s92 = sphi 0, %s89
      %s93 = sphi 0, %s92
      %s109 = sphi 0, %s93
      %s113 = sphi 0, %s113
      %s115 = sphi 0, %s113
      %s116 = sphi 0, %s115
      %s130 = sphi 0, %s116
      %s134 = sphi 0, %s134
      %s136 = sphi 0, %s134
      %s137 = sphi 0, %s136
      %s151 = sphi 0, %s137
      %s155 = sphi 0, %s155
      %s157 = sphi 0, %s155
      %s158 = sphi 0, %s157
      %s172 = sphi 0, %s158
      %s178 = sphi 0, %s180
      %s181 = sphi 0, %s178
      %s182 = sphi 0, %s181
      %s198 = sphi 0, %s182
    $region4: #{tpu_custom_call.1} parent=1 // loop_header_branch
      %30 = sbr.rel (%p28) target = $region8
    $region5: #{tpu_custom_call.1} parent=1 // loop_body
      %s32 = ssub.s32 %s27, 1
      %s33 = ssub.s32 %s27, 2
      %s34 = sadd.s32 %s27, 1
      %s35 = ssub.s32 %s27, %s34
      %p36 = scmp.eq.s32.totalorder %s35, 0
      %s38 = sadd.s32 %s37, 1
      %s39 = scalar_select %p36, %s37, %s38
      %p42 = pneg %p36
      %p43 = scmp.eq.s32.totalorder %s27, 1
      %p44 = por %p42, %p43
      %p45 = scmp.ne.s32.totalorder %s37, %s40
      %p46 = scmp.eq.s32.totalorder %s27, 0
      %p47 = por %p45, %p46
      %p48 = scmp.ne.s32.totalorder %s37, %s40
      %p49 = scmp.eq.s32.totalorder %s32, 1
      %p50 = por %p48, %p49
      %p51 = scmp.ne.s32.totalorder %s40, %s41
      %p52 = scmp.eq.s32.totalorder %s32, 0
      %p53 = por %p51, %p52
      %p54 = scmp.ne.s32.totalorder %s40, %s41
      %p55 = scmp.eq.s32.totalorder %s33, 1
      %p56 = por %p54, %p55
      %p58 = scmp.ne.s32.totalorder %s41, %s57
      %p59 = scmp.eq.s32.totalorder %s33, 0
      %p60 = por %p58, %p59
      %s61 = ssub.s32 %s27, %s34
      %p62 = scmp.eq.s32.totalorder %s61, 0
      %s64 = sadd.s32 %s63, 1
      %s65 = scalar_select %p62, %s63, %s64
      %p68 = pneg %p62
      %p69 = scmp.eq.s32.totalorder %s27, 1
      %p70 = por %p68, %p69
      %p71 = scmp.ne.s32.totalorder %s63, %s66
      %p72 = scmp.eq.s32.totalorder %s27, 0
      %p73 = por %p71, %p72
      %p74 = scmp.ne.s32.totalorder %s63, %s66
      %p75 = scmp.eq.s32.totalorder %s32, 1
      %p76 = por %p74, %p75
      %p77 = scmp.ne.s32.totalorder %s66, %s67
      %p78 = scmp.eq.s32.totalorder %s32, 0
      %p79 = por %p77, %p78
      %p80 = scmp.ne.s32.totalorder %s66, %s67
      %p81 = scmp.eq.s32.totalorder %s33, 1
      %p82 = por %p80, %p81
      %p84 = scmp.ne.s32.totalorder %s67, %s83
      %p85 = scmp.eq.s32.totalorder %s33, 0
      %p86 = por %p84, %p85
      %s87 = ssub.s32 %s27, %s34
      %p88 = scmp.eq.s32.totalorder %s87, 0
      %s90 = sadd.s32 %s89, 1
      %s91 = scalar_select %p88, %s89, %s90
      %p94 = pneg %p88
      %p95 = scmp.eq.s32.totalorder %s27, 1
      %p96 = por %p94, %p95
      %p97 = scmp.ne.s32.totalorder %s89, %s92
      %p98 = scmp.eq.s32.totalorder %s27, 0
      %p99 = por %p97, %p98
      %p100 = scmp.ne.s32.totalorder %s89, %s92
      %p101 = scmp.eq.s32.totalorder %s32, 1
      %p102 = por %p100, %p101
      %p103 = scmp.ne.s32.totalorder %s92, %s93
      %p104 = scmp.eq.s32.totalorder %s32, 0
      %p105 = por %p103, %p104
      %p106 = scmp.ne.s32.totalorder %s92, %s93
      %p107 = scmp.eq.s32.totalorder %s33, 1
      %p108 = por %p106, %p107
      %p110 = scmp.ne.s32.totalorder %s93, %s109
      %p111 = scmp.eq.s32.totalorder %s33, 0
      %p112 = por %p110, %p111
      %s114 = sadd.s32 %s113, 1
      %p117 = scmp.eq.s32.totalorder %s27, 1
      %p118 = scmp.ne.s32.totalorder %s113, %s115
      %p119 = scmp.eq.s32.totalorder %s27, 0
      %p120 = por %p118, %p119
      %p121 = scmp.ne.s32.totalorder %s113, %s115
      %p122 = scmp.eq.s32.totalorder %s32, 1
      %p123 = por %p121, %p122
      %p124 = scmp.ne.s32.totalorder %s115, %s116
      %p125 = scmp.eq.s32.totalorder %s32, 0
      %p126 = por %p124, %p125
      %p127 = scmp.ne.s32.totalorder %s115, %s116
      %p128 = scmp.eq.s32.totalorder %s33, 1
      %p129 = por %p127, %p128
      %p131 = scmp.ne.s32.totalorder %s116, %s130
      %p132 = scmp.eq.s32.totalorder %s33, 0
      %p133 = por %p131, %p132
      %s135 = sadd.s32 %s134, 1
      %p138 = scmp.eq.s32.totalorder %s27, 1
      %p139 = scmp.ne.s32.totalorder %s134, %s136
      %p140 = scmp.eq.s32.totalorder %s27, 0
      %p141 = por %p139, %p140
      %p142 = scmp.ne.s32.totalorder %s134, %s136
      %p143 = scmp.eq.s32.totalorder %s32, 1
      %p144 = por %p142, %p143
      %p145 = scmp.ne.s32.totalorder %s136, %s137
      %p146 = scmp.eq.s32.totalorder %s32, 0
      %p147 = por %p145, %p146
      %p148 = scmp.ne.s32.totalorder %s136, %s137
      %p149 = scmp.eq.s32.totalorder %s33, 1
      %p150 = por %p148, %p149
      %p152 = scmp.ne.s32.totalorder %s137, %s151
      %p153 = scmp.eq.s32.totalorder %s33, 0
      %p154 = por %p152, %p153
      %s156 = sadd.s32 %s155, 1
      %p159 = scmp.eq.s32.totalorder %s27, 1
      %p160 = scmp.ne.s32.totalorder %s155, %s157
      %p161 = scmp.eq.s32.totalorder %s27, 0
      %p162 = por %p160, %p161
      %p163 = scmp.ne.s32.totalorder %s155, %s157
      %p164 = scmp.eq.s32.totalorder %s32, 1
      %p165 = por %p163, %p164
      %p166 = scmp.ne.s32.totalorder %s157, %s158
      %p167 = scmp.eq.s32.totalorder %s32, 0
      %p168 = por %p166, %p167
      %p169 = scmp.ne.s32.totalorder %s157, %s158
      %p170 = scmp.eq.s32.totalorder %s33, 1
      %p171 = por %p169, %p170
      %p173 = scmp.ne.s32.totalorder %s158, %s172
      %p174 = scmp.eq.s32.totalorder %s33, 0
      %p175 = por %p173, %p174
      %s176 = ssub.s32 %s27, %s34
      %p177 = scmp.eq.s32.totalorder %s176, 0
      %s179 = sadd.s32 %s178, 1
      %s180 = scalar_select %p177, %s178, %s179
      %p183 = pneg %p177
      %p184 = scmp.eq.s32.totalorder %s27, 1
      %p185 = por %p183, %p184
      %p186 = scmp.ne.s32.totalorder %s178, %s181
      %p187 = scmp.eq.s32.totalorder %s27, 0
      %p188 = por %p186, %p187
      %p189 = scmp.ne.s32.totalorder %s178, %s181
      %p190 = scmp.eq.s32.totalorder %s32, 1
      %p191 = por %p189, %p190
      %p192 = scmp.ne.s32.totalorder %s181, %s182
      %p193 = scmp.eq.s32.totalorder %s32, 0
      %p194 = por %p192, %p193
      %p195 = scmp.ne.s32.totalorder %s181, %s182
      %p196 = scmp.eq.s32.totalorder %s33, 1
      %p197 = por %p195, %p196
      %p199 = scmp.ne.s32.totalorder %s182, %s198
      %p200 = scmp.eq.s32.totalorder %s33, 0
      %p201 = por %p199, %p200
      %p202 = scmp.le.s32.totalorder 1, %s27
      %p203 = scmp.lt.s32.totalorder %s27, 3
      %p204 = pnand %p202, %p203
      %p205 = pneg %p204
      // Predicated region
      $region9: #{tpu_custom_call.1} parent=5 // pred_check
        _
      $region10: #{tpu_custom_call.1} parent=5 // pred_check_branch
        %207 = sbr.rel (%p204) target = $region12
      $region11: #{tpu_custom_call.1} parent=5 // pred_region
        %s208 = ssub.s32 %s27, 1
        // Predicated region
        $region13: #{tpu_custom_call.1} parent=11 // pred_check
          %p209 = pneg %p126
        $region14: #{tpu_custom_call.1} parent=11 // pred_check_branch
          %211 = sbr.rel (%p209) target = $region16
        $region15: #{tpu_custom_call.1} parent=11 // pred_region
          %213 = vsyncadd [#allocation7], 0
          %s214 = sshll.u32 %s5, 4
          %s215 = int_to_ptr.hbm [resolvable:$true] %s214
          %s216 = sshll.u32 [#allocation6], 4
          %s217 = int_to_ptr.vmem [resolvable:$true] %s216
          %222 = dma.hbm_to_vmem [thread:$0]  %s215, 1152, %s217, [#allocation7], 128, 128, 8
        $region16: #{tpu_custom_call.1} parent=11 // pred_fallthru
          _
        // Predicated region
        $region17: #{tpu_custom_call.1} parent=11 // pred_check
          %p223 = pneg %p147
        $region18: #{tpu_custom_call.1} parent=11 // pred_check_branch
          %225 = sbr.rel (%p223) target = $region20
        $region19: #{tpu_custom_call.1} parent=11 // pred_region
          %227 = vsyncadd [#allocation10], 0
          %s228 = sshll.u32 %s6, 4
          %s229 = int_to_ptr.hbm [resolvable:$true] %s228
          %s230 = sshll.u32 [#allocation9], 4
          %s231 = int_to_ptr.vmem [resolvable:$true] %s230
          %236 = dma.hbm_to_vmem [thread:$0]  %s229, 2048, %s231, [#allocation10], 128, 128, 8
        $region20: #{tpu_custom_call.1} parent=11 // pred_fallthru
          _
        // Predicated region
        $region21: #{tpu_custom_call.1} parent=11 // pred_check
          %p237 = pneg %p168
        $region22: #{tpu_custom_call.1} parent=11 // pred_check_branch
          %239 = sbr.rel (%p237) target = $region24
        $region23: #{tpu_custom_call.1} parent=11 // pred_region
          _
        $region24: #{tpu_custom_call.1} parent=11 // pred_fallthru
          _
      $region12: #{tpu_custom_call.1} parent=5 // pred_fallthru
        _
      %p240 = scmp.lt.s32.totalorder %s27, 2
      // Predicated region
      $region25: #{tpu_custom_call.1} parent=5 // pred_check
        %p241 = pneg %p240
      $region26: #{tpu_custom_call.1} parent=5 // pred_check_branch
        %243 = sbr.rel (%p241) target = $region28
      $region27: #{tpu_custom_call.1} parent=5 // pred_region
        // Predicated region
        $region29: #{tpu_custom_call.1} parent=27 // pred_check
          %p244 = pneg %p47
        $region30: #{tpu_custom_call.1} parent=27 // pred_check_branch
          %246 = sbr.rel (%p244) target = $region32
        $region31: #{tpu_custom_call.1} parent=27 // pred_region
          %p247 = scmp.lt.s32.totalorder %s27, 1
          %s248 = scalar_select %p247, %s27, 1
          %s249 = smul.addr %s248, 8
          %s250 = scalar_lea.vmem %s1, %s249
        $region32: #{tpu_custom_call.1} parent=27 // pred_fallthru
          _
        // Predicated region
        $region33: #{tpu_custom_call.1} parent=27 // pred_check
          %p251 = pneg %p73
        $region34: #{tpu_custom_call.1} parent=27 // pred_check_branch
          %253 = sbr.rel (%p251) target = $region36
        $region35: #{tpu_custom_call.1} parent=27 // pred_region
          %p254 = scmp.lt.s32.totalorder %s27, 1
          %s255 = scalar_select %p254, %s27, 1
          %s256 = smul.addr %s255, 8
          %s257 = scalar_lea.vmem %s2, %s256
        $region36: #{tpu_custom_call.1} parent=27 // pred_fallthru
          _
        // Predicated region
        $region37: #{tpu_custom_call.1} parent=27 // pred_check
          %p258 = pneg %p99
        $region38: #{tpu_custom_call.1} parent=27 // pred_check_branch
          %260 = sbr.rel (%p258) target = $region40
        $region39: #{tpu_custom_call.1} parent=27 // pred_region
          %p261 = scmp.lt.s32.totalorder %s27, 1
          %s262 = scalar_select %p261, %s27, 1
          %s263 = smul.addr %s262, 8
          %s264 = scalar_lea.vmem %s3, %s263
        $region40: #{tpu_custom_call.1} parent=27 // pred_fallthru
          _
      $region28: #{tpu_custom_call.1} parent=5 // pred_fallthru
        _
      %p265 = scmp.le.s32.totalorder 1, %s27
      %p266 = scmp.lt.s32.totalorder %s27, 3
      %p267 = pnand %p265, %p266
      %p268 = pneg %p267
      // Predicated region
      $region41: #{tpu_custom_call.1} parent=5 // pred_check
        _
      $region42: #{tpu_custom_call.1} parent=5 // pred_check_branch
        %270 = sbr.rel (%p267) target = $region44
      $region43: #{tpu_custom_call.1} parent=5 // pred_region
        %s271 = ssub.s32 %s27, 1
        // Predicated region
        $region45: #{tpu_custom_call.1} parent=43 // pred_check
          %p272 = pneg %p126
        $region46: #{tpu_custom_call.1} parent=43 // pred_check_branch
          %274 = sbr.rel (%p272) target = $region48
        $region47: #{tpu_custom_call.1} parent=43 // pred_region
          %276 = dma.done [#allocation7], 1152
        $region48: #{tpu_custom_call.1} parent=43 // pred_fallthru
          _
        // Predicated region
        $region49: #{tpu_custom_call.1} parent=43 // pred_check
          %p277 = pneg %p147
        $region50: #{tpu_custom_call.1} parent=43 // pred_check_branch
          %279 = sbr.rel (%p277) target = $region52
        $region51: #{tpu_custom_call.1} parent=43 // pred_region
          %281 = dma.done [#allocation10], 2048
        $region52: #{tpu_custom_call.1} parent=43 // pred_fallthru
          _
        %p282 = scmp.lt.s32.totalorder %s32, 1
        %s283 = scalar_select %p282, %s32, 1
        %s284 = smul.addr %s283, 8
        %s285 = scalar_lea.vmem %s1, %s284
        %p286 = pneg %p53
        %p287 = pneg %p50
        %p288 = scmp.lt.s32.totalorder %s32, 1
        %s289 = scalar_select %p288, %s32, 1
        %s290 = smul.addr %s289, 8
        %s291 = scalar_lea.vmem %s2, %s290
        %p292 = pneg %p79
        %p293 = pneg %p76
        %p294 = scmp.lt.s32.totalorder %s32, 1
        %s295 = scalar_select %p294, %s32, 1
        %s296 = smul.addr %s295, 8
        %s297 = scalar_lea.vmem %s3, %s296
        %p298 = pneg %p105
        %p299 = pneg %p102
        %p300 = pneg %p126
        %p301 = pneg %p123
        %p302 = pneg %p147
        %p303 = pneg %p144
        %p304 = pneg %p168
        %p305 = pneg %p165
        %p306 = pneg %p194
        %p307 = pneg %p191
        %s308 = sand.u32 %s181, 1
        %s309 = scalar_lea.sflag [#allocation8], %s308
        %s310 = sand.u32 %s181, 1
        %s311 = smul.addr %s310, 16
        %s312 = scalar_lea.vmem [#allocation11], %s311
        %p313 = scmp.lt.s32.totalorder %s32, 1
        %s314 = scalar_select %p313, %s32, 1
        %s315 = smul.addr %s314, 8
        %s316 = scalar_lea.vmem %s1, %s315
        %p317 = scmp.lt.s32.totalorder %s32, 1
        %s318 = scalar_select %p317, %s32, 1
        %s319 = smul.addr %s318, 8
        %s320 = scalar_lea.vmem %s2, %s319
        %p321 = scmp.lt.s32.totalorder %s32, 1
        %s322 = scalar_select %p321, %s32, 1
        %s323 = smul.addr %s322, 8
        %s324 = scalar_lea.vmem %s3, %s323
        %s325 = smul.u32 %s32, 8
        loop: start=0, step=1, limit=8
        $region53: #{tpu_custom_call.1} parent=43 // loop_pre_header
          _
        $region54: #{tpu_custom_call.1} parent=43 // loop_header
          %s327 = sphi 0, %s331
          %p328 = scmp.ge.s32.totalorder %s327, 8
        $region55: #{tpu_custom_call.1} parent=43 // loop_header_branch
          %330 = sbr.rel (%p328) target = $region59
        $region56: #{tpu_custom_call.1} parent=43 // loop_body
          %s332 = sadd.s32 %s325, %s327
          %s333 = sld [smem:[#allocation5 + %s332]]
          %s334 = scalar_lea.hbm %s4, %s333
          %s335 = scalar_lea.vmem [#allocation2], %s327
          // Predicated region
          $region60: #{tpu_custom_call.1} parent=56 // pred_check
            _
          $region61: #{tpu_custom_call.1} parent=56 // pred_check_branch
            %337 = sbr.rel target = $region63
          $region62: #{tpu_custom_call.1} parent=56 // pred_region
            %338 = sst [smem:[#allocation14]] [#allocation13]
            %339 = sst [smem:[#allocation15]] [#allocation12]
          $region63: #{tpu_custom_call.1} parent=56 // pred_fallthru
            _
          %341 = shalt.err (0)
          %s343 = sshll.u32 %s334, 4
          %s344 = int_to_ptr.hbm [resolvable:$true] %s343
          %s345 = sshll.u32 %s335, 4
          %s346 = int_to_ptr.vmem [resolvable:$true] %s345
          %348 = dma.hbm_to_vmem [thread:$0]  %s344, 16, %s346, [#allocation3]
        $region57: #{tpu_custom_call.1} parent=43 // loop_footer
          %s331 = sadd.s32 1, %s327
        $region58: #{tpu_custom_call.1} parent=43 // loop_footer_branch
          %326 = sbr.rel target = $region54
        $region59: #{tpu_custom_call.1} parent=43 // loop_exit
          _
        %v349 = vld [vmem:[%s7] sm:$0xff]
        %v350 = vlaneseq
        %v351 = vand.u32 %v350, 127
        %v352 = vld [vmem:[#allocation6] sm:$0xff]
        %v353 = vld [vmem:[#allocation6 + $0x8] sm:$0xff]
        %v354 = vld [vmem:[#allocation6 + $0x10] sm:$0xff]
        %v355 = vld [vmem:[#allocation6 + $0x18] sm:$0xff]
        %v356 = vld [vmem:[#allocation6 + $0x20] sm:$0xff]
        %v357 = vld [vmem:[#allocation6 + $0x28] sm:$0xff]
        %v358 = vld [vmem:[#allocation6 + $0x30] sm:$0xff]
        %v359 = vld [vmem:[#allocation6 + $0x38] sm:$0xff]
        %v360 = vld [vmem:[#allocation6 + $0x40] sm:$0x3]
        %v361 = vld [vmem:[%s324] sm:$0xff]
        %v362 = vld [vmem:[#allocation9] sm:$0xff]
        %v363 = vld [vmem:[#allocation9 + $0x8] sm:$0xff]
        %v364 = vld [vmem:[#allocation9 + $0x10] sm:$0xff]
        %v365 = vld [vmem:[#allocation9 + $0x18] sm:$0xff]
        %v366 = vld [vmem:[#allocation9 + $0x20] sm:$0xff]
        %v367 = vld [vmem:[#allocation9 + $0x28] sm:$0xff]
        %v368 = vld [vmem:[#allocation9 + $0x30] sm:$0xff]
        %v369 = vld [vmem:[#allocation9 + $0x38] sm:$0xff]
        %v370 = vld [vmem:[#allocation9 + $0x40] sm:$0xff]
        %v371 = vld [vmem:[#allocation9 + $0x48] sm:$0xff]
        %v372 = vld [vmem:[#allocation9 + $0x50] sm:$0xff]
        %v373 = vld [vmem:[#allocation9 + $0x58] sm:$0xff]
        %v374 = vld [vmem:[#allocation9 + $0x60] sm:$0xff]
        %v375 = vld [vmem:[#allocation9 + $0x68] sm:$0xff]
        %v376 = vld [vmem:[#allocation9 + $0x70] sm:$0xff]
        %v377 = vld [vmem:[#allocation9 + $0x78] sm:$0xff]
        %v378 = vperm.slane %v349, 0
        %379 = vmatpush.msra.mxu0 %v377
        %380 = vmatpush.msra.mxu0 %v376
        %381 = vmatpush.msra.mxu0 %v375
        %382 = vmatpush.msra.mxu0 %v374
        %383 = vmatpush.msra.mxu0 %v373
        %384 = vmatpush.msra.mxu0 %v372
        %385 = vmatpush.msra.mxu0 %v371
        %386 = vmatpush.msra.mxu0 %v370
        %387 = vmatpush.msra.mxu0 %v369
        %388 = vmatpush.msra.mxu0 %v368
        %389 = vmatpush.msra.mxu0 %v367
        %390 = vmatpush.msra.mxu0 %v366
        %391 = vmatpush.msra.mxu0 %v365
        %392 = vmatpush.msra.mxu0 %v364
        %393 = vmatpush.msra.mxu0 %v363
        %394 = vmatpush.msra.mxu0 %v362
        %395 = vmatmul.f32.gmra.mxu0 %v361
        %v396 = vpop.f32.mrf.mxu0
        %v397 = vadd.f32 %v378, %v396
        %398 = vdwg.mxu0
        %399 = vadd.xlane.f32.xlu0 %v397
        %v400 = vpop.xlane.xlu0 %399
        %v401 = vrcp.pop 128.0
        %v402 = vmul.f32 128.0, %v401
        %v403 = vsub.f32 1.0, %v402
        %v404 = vmul.f32 %v401, %v403
        %v405 = vadd.f32 %v401, %v404
        %vm406 = vweird.f32 %v401
        %v407 = vsel %vm406, %v401, %v405
        %v408 = vmul.f32 %v400, %v407
        %v409 = vsub.f32 %v397, %v408
        %v410 = vmul.f32 %v409, %v409
        %411 = vadd.xlane.f32.xlu0 %v410
        %v412 = vpop.xlane.xlu0 %411
        %v413 = vmul.f32 %v412, %v407
        %v414 = vadd.f32 %v413, 1e-12
        %v415 = vrsqrt.pop %v414
        %v416 = vmul.f32 %v415, %v414
        %v417 = vmul.f32 %v416, %v415
        %v418 = vmul.f32 0.5, %v417
        %v419 = vsub.f32 1.5, %v418
        %v420 = vmul.f32 %v415, %v419
        %vm421 = vweird.f32 %v414
        %vm422 = vweird.f32 %v415
        %vm423 = vmor %vm421, %vm422
        %v424 = vsel %vm423, %v415, %v420
        %v425 = vmul.f32 %v409, %v424
        %v426 = vperm.slane %v349, 1
        %v427 = vmul.f32 %v425, %v426
        %v428 = vperm.slane %v349, 2
        %v429 = vadd.f32 %v427, %v428
        %v430 = vld [vmem:[%s320] sm:$0xff]
        %431 = vset.pattern.permute.xlu0 0
        %432 = vperm.xlu0 %431, %v430
        %v433 = vpop.permute.xlu0 %432
        %vm434 = vcmp.eq.s32.totalorder %v351, %v433
        %435 = vset.pattern.permute.xlu0 1
        %436 = vperm.xlu0 %435, %v430
        %v437 = vpop.permute.xlu0 %436
        %vm438 = vcmp.eq.s32.totalorder %v351, %v437
        %vm439 = vmor %vm434, %vm438
        %v440 = vsel %vm439, 1, 0
        %v441 = vcvt.s32.f32 %v440
        %vm442 = vcmask 539648
        %v444 = vsel %vm442, %v441, 0
        %vm446 = vcmask 1041408
        %v448 = vsel %vm446, %v360, 0
        %450 = vmatpush.msra.mxu0 0.0
        %451 = vmatpush.msra.mxu0 0.0
        %452 = vmatpush.msra.mxu0 0.0
        %453 = vmatpush.msra.mxu0 0.0
        %454 = vmatpush.msra.mxu0 0.0
        %455 = vmatpush.msra.mxu0 0.0
        %456 = vmatpush.msra.mxu0 0.0
        %457 = vmatpush.msra.mxu0 %v448
        %458 = vmatpush.msra.mxu0 %v359
        %459 = vmatpush.msra.mxu0 %v358
        %460 = vmatpush.msra.mxu0 %v357
        %461 = vmatpush.msra.mxu0 %v356
        %462 = vmatpush.msra.mxu0 %v355
        %463 = vmatpush.msra.mxu0 %v354
        %464 = vmatpush.msra.mxu0 %v353
        %465 = vmatpush.msra.mxu0 %v352
        %466 = vmatmul.f32.gmra.mxu0 %v444
        %v467 = vpop.f32.mrf.mxu0
        %v468 = vadd.f32 0.0, %v467
        %469 = vdwg.mxu0
        %v470 = vadd.f32 %v429, %v468
        %471 = vadd.xlane.f32.xlu0 %v470
        %v472 = vpop.xlane.xlu0 %471
        %v473 = vmul.f32 %v472, %v407
        %v474 = vsub.f32 %v470, %v473
        %v475 = vmul.f32 %v474, %v474
        %476 = vadd.xlane.f32.xlu0 %v475
        %v477 = vpop.xlane.xlu0 %476
        %v478 = vmul.f32 %v477, %v407
        %v479 = vadd.f32 %v478, 1e-12
        %v480 = vrsqrt.pop %v479
        %v481 = vmul.f32 %v480, %v479
        %v482 = vmul.f32 %v481, %v480
        %v483 = vmul.f32 0.5, %v482
        %v484 = vsub.f32 1.5, %v483
        %v485 = vmul.f32 %v480, %v484
        %vm486 = vweird.f32 %v479
        %vm487 = vweird.f32 %v480
        %vm488 = vmor %vm486, %vm487
        %v489 = vsel %vm488, %v480, %v485
        %v490 = vmul.f32 %v474, %v489
        %v491 = vperm.slane %v349, 5
        %v492 = vmul.f32 %v490, %v491
        %v493 = vperm.slane %v349, 6
        %v494 = vadd.f32 %v492, %v493
        %495 = vst [vmem:[%s312 + $0x8] sm:$0xff] %v494
        %v496 = vld [vmem:[%s316] sm:$0xff]
        %497 = vset.pattern.permute.xlu0 0
        %498 = vperm.xlu0 %497, %v496
        %v499 = vpop.permute.xlu0 %498
        %vm500 = vcmp.eq.s32.totalorder %v351, %v499
        %501 = vset.pattern.permute.xlu0 1
        %502 = vperm.xlu0 %501, %v496
        %v503 = vpop.permute.xlu0 %502
        %vm504 = vcmp.eq.s32.totalorder %v351, %v503
        %vm505 = vmor %vm500, %vm504
        %v506 = vsel %vm505, 1, 0
        %v507 = vcvt.s32.f32 %v506
        %v509 = vsel %vm442, %v507, 0
        %511 = vmatpush.msra.mxu0 0.0
        %512 = vmatpush.msra.mxu0 0.0
        %513 = vmatpush.msra.mxu0 0.0
        %514 = vmatpush.msra.mxu0 0.0
        %515 = vmatpush.msra.mxu0 0.0
        %516 = vmatpush.msra.mxu0 0.0
        %517 = vmatpush.msra.mxu0 0.0
        %518 = vmatpush.msra.mxu0 %v448
        %519 = vmatpush.msra.mxu0 %v359
        %520 = vmatpush.msra.mxu0 %v358
        %521 = vmatpush.msra.mxu0 %v357
        %522 = vmatpush.msra.mxu0 %v356
        %523 = vmatpush.msra.mxu0 %v355
        %524 = vmatpush.msra.mxu0 %v354
        %525 = vmatpush.msra.mxu0 %v353
        %526 = vmatpush.msra.mxu0 %v352
        %527 = vmatmul.f32.gmra.mxu0 %v509
        %v528 = vpop.f32.mrf.mxu0
        %v529 = vadd.f32 0.0, %v528
        %530 = vdwg.mxu0
        loop: start=0, step=1, limit=8
        $region64: #{tpu_custom_call.1} parent=43 // loop_pre_header
          _
        $region65: #{tpu_custom_call.1} parent=43 // loop_header
          %s532 = sphi 0, %s536
          %p533 = scmp.ge.s32.totalorder %s532, 8
        $region66: #{tpu_custom_call.1} parent=43 // loop_header_branch
          %535 = sbr.rel (%p533) target = $region70
        $region67: #{tpu_custom_call.1} parent=43 // loop_body
          %538 = dma.done [#allocation3], 16
        $region68: #{tpu_custom_call.1} parent=43 // loop_footer
          %s536 = sadd.s32 1, %s532
        $region69: #{tpu_custom_call.1} parent=43 // loop_footer_branch
          %531 = sbr.rel target = $region65
        $region70: #{tpu_custom_call.1} parent=43 // loop_exit
          _
        %v539 = vld [vmem:[#allocation2] sm:$0xff]
        %v540 = vadd.f32 %v539, %v529
        %541 = vadd.xlane.f32.xlu0 %v540
        %v542 = vpop.xlane.xlu0 %541
        %v543 = vmul.f32 %v542, %v407
        %v544 = vsub.f32 %v540, %v543
        %v545 = vmul.f32 %v544, %v544
        %546 = vadd.xlane.f32.xlu0 %v545
        %v547 = vpop.xlane.xlu0 %546
        %v548 = vmul.f32 %v547, %v407
        %v549 = vadd.f32 %v548, 1e-12
        %v550 = vrsqrt.pop %v549
        %v551 = vmul.f32 %v550, %v549
        %v552 = vmul.f32 %v551, %v550
        %v553 = vmul.f32 0.5, %v552
        %v554 = vsub.f32 1.5, %v553
        %v555 = vmul.f32 %v550, %v554
        %vm556 = vweird.f32 %v549
        %vm557 = vweird.f32 %v550
        %vm558 = vmor %vm556, %vm557
        %v559 = vsel %vm558, %v550, %v555
        %v560 = vmul.f32 %v544, %v559
        %v561 = vperm.slane %v349, 3
        %v562 = vmul.f32 %v560, %v561
        %v563 = vperm.slane %v349, 4
        %v564 = vadd.f32 %v562, %v563
        %565 = vst [vmem:[%s312] sm:$0xff] %v564
        %s566 = sand.u32 %s181, 1
        %s567 = scalar_lea.sflag [#allocation8], %s566
        %s568 = sand.u32 %s181, 1
        %s569 = smul.addr %s568, 16
        %s570 = scalar_lea.vmem [#allocation11], %s569
        // Predicated region
        $region71: #{tpu_custom_call.1} parent=43 // pred_check
          %p571 = pneg %p191
        $region72: #{tpu_custom_call.1} parent=43 // pred_check_branch
          %573 = sbr.rel (%p571) target = $region74
        $region73: #{tpu_custom_call.1} parent=43 // pred_region
          %575 = vsyncadd %s567, 0
          %s576 = smul.addr %s32, 2
          %s577 = smul.addr %s576, 8
          %s578 = scalar_lea.hbm %s8, %s577
          %s579 = sshll.u32 %s570, 4
          %s580 = int_to_ptr.vmem [resolvable:$true] %s579
          %s581 = sshll.u32 %s578, 4
          %s582 = int_to_ptr.hbm [resolvable:$true] %s581
          %587 = dma.vmem_to_hbm [thread:$0]  %s580, 256, %s582, %s567, 128, 128, 8
        $region74: #{tpu_custom_call.1} parent=43 // pred_fallthru
          _
      $region44: #{tpu_custom_call.1} parent=5 // pred_fallthru
        _
      %p588 = scmp.le.s32.totalorder 2, %s27
      // Predicated region
      $region75: #{tpu_custom_call.1} parent=5 // pred_check
        %p589 = pneg %p588
      $region76: #{tpu_custom_call.1} parent=5 // pred_check_branch
        %591 = sbr.rel (%p589) target = $region78
      $region77: #{tpu_custom_call.1} parent=5 // pred_region
        %s592 = ssub.s32 %s27, 2
        // Predicated region
        $region79: #{tpu_custom_call.1} parent=77 // pred_check
          %p593 = pneg %p197
        $region80: #{tpu_custom_call.1} parent=77 // pred_check_branch
          %595 = sbr.rel (%p593) target = $region82
        $region81: #{tpu_custom_call.1} parent=77 // pred_region
          %s596 = sand.u32 %s182, 1
          %s597 = scalar_lea.sflag [#allocation8], %s596
          %s598 = sand.u32 %s182, 1
          %s599 = smul.addr %s598, 16
          %s600 = scalar_lea.vmem [#allocation11], %s599
          %602 = dma.done %s597, 256
        $region82: #{tpu_custom_call.1} parent=77 // pred_fallthru
          _
      $region78: #{tpu_custom_call.1} parent=5 // pred_fallthru
        _
    $region6: #{tpu_custom_call.1} parent=1 // loop_footer
      %s31 = sadd.s32 1, %s27
    $region7: #{tpu_custom_call.1} parent=1 // loop_footer_branch
      %26 = sbr.rel target = $region3
    $region8: #{tpu_custom_call.1} parent=1 // loop_exit
      _
    %603 = vsyncpa [#allocation7], 1
    %s604 = scalar_lea.sflag [#allocation7], 1
    %605 = vsyncpa %s604, 1
    %606 = vsyncpa [#allocation10], 1
    %607 = vsyncpa [#allocation8], 1
    %s608 = scalar_lea.sflag [#allocation8], 1
    %609 = vsyncpa %s608, 1
  %610 = vsyncmov [#allocation3]
  %s611 = vpop.sfrf %610
  %p612 = scmp.eq.s32.totalorder %s611, 0
  %p613 = pneg %p612
  %615 = shalt.err (%p613)

</llo_original>
